<compile_context>
chip_gen: v7x
topology: tpu7x:2x2x1
jax: 0.10.0
libtpu: 0.0.40
codegen_flags: <defaults>
</compile_context>

<pallas_src>
import jax
import jax.numpy as jnp
from jax.experimental import pallas as pl
from jax.experimental.pallas import tpu as pltpu


_BLOCK_BYTE_BUDGET = 4 << 20    # ~4 MiB per (input or output) block
_LANE_RUN_BYTES = 16 << 10      # target >=16 KiB contiguous per-row DMA run
_XLA_FAST_PATH_BYTES = 2 << 20  # below this, XLA's fused slice wins


def _round_up(x: int, m: int) -> int:
    return ((x + m - 1) // m) * m


def _chomp_copy_kernel(x_ref, o_ref):
    # x_ref: (TR, TL_in), o_ref: (TR, TL_out) with TL_out <= TL_in.
    # In the common tiled case TL_in == TL_out and this is a straight
    # full-block VMEM load/store; edge blocks are masked by Pallas.
    o_ref[...] = x_ref[:, : o_ref.shape[1]]


def chomp1d(x: jax.Array, chomp_size: int, *, force_pallas: bool = False) -> jax.Array:
    """Pallas equivalent of Chomp1d(chomp_size)(x) for x of shape (N, C, L)."""
    n, c, l = x.shape
    assert chomp_size >= 0

    # PyTorch: x[:, :, :-0] == x[:, :, :0] -> empty along length.  Same if
    # chomp_size >= L.  No kernel needed for an empty result.
    l_out = l - chomp_size if chomp_size > 0 else 0
    if l_out <= 0:
        return x[:, :, :0]

    itemsize = x.dtype.itemsize

    # Fast path: for small copies the pallas_call / per-grid-step overhead
    # dominates; let XLA emit (or fuse away) the slice-copy instead.
    if not force_pallas and x.size * itemsize < _XLA_FAST_PATH_BYTES:
        return x[:, :, :l_out]

    # Flatten (N, C) -> dense rows (free reshape on a contiguous NCL array).
    rows = n * c
    x2 = x.reshape(rows, l)

    sub_mult = max(8, 32 // itemsize)   # 8 f32 / 16 bf16 / 32 int8 rows
    lane_cap = max(128, (_LANE_RUN_BYTES // itemsize) // 128 * 128)

    # Lane (length) tiling: balanced multiples of 128 so both input and
    # output blocks stay lane-dense and the chomp is expressed purely via
    # BlockSpec coverage.  The last block may overrun L_out (or even L by a
    # sliver); Pallas masks the edge.
    if l_out >= 128:
        nblk_l = pl.cdiv(l_out, lane_cap)
        tl_out = _round_up(pl.cdiv(l_out, nblk_l), 128)
        tl_in = tl_out
    else:
        # Tiny length: block last dims must equal the full array dims, so the
        # input block carries the whole L and the body slices off the tail.
        tl_out = l_out
        tl_in = l
    grid_l = pl.cdiv(l_out, tl_out)

    # Row (sublane) tiling from the remaining byte budget, balanced as well.
    blk_lane_bytes = max(tl_in, tl_out) * itemsize
    row_cap = max(sub_mult, (_BLOCK_BYTE_BUDGET // blk_lane_bytes) // sub_mult * sub_mult)
    if rows <= row_cap:
        tr = rows
    else:
        nblk_r = pl.cdiv(rows, row_cap)
        tr = _round_up(pl.cdiv(rows, nblk_r), sub_mult)
    grid_r = pl.cdiv(rows, tr)

    # v7x megacore: guarantee >=2 grid steps so both TensorCores stream.
    if grid_r * grid_l == 1:
        if l_out >= 256:
            tl_out = tl_in = _round_up(pl.cdiv(l_out, 2), 128)
            grid_l = pl.cdiv(l_out, tl_out)
        elif rows >= 2 * sub_mult:
            tr = _round_up(pl.cdiv(rows, 2), sub_mult)
            grid_r = pl.cdiv(rows, tr)

    grid = (grid_r, grid_l)

    out2 = pl.pallas_call(
        _chomp_copy_kernel,
        out_shape=jax.ShapeDtypeStruct((rows, l_out), x.dtype),
        grid_spec=pltpu.PrefetchScalarGridSpec(
            num_scalar_prefetch=0,
            grid=grid,
            in_specs=[pl.BlockSpec((tr, tl_in), lambda i, j: (i, j))],
            out_specs=pl.BlockSpec((tr, tl_out), lambda i, j: (i, j)),
        ),
        # Advisory: this is a pure memory-bound copy (read + write L_out).
        cost_estimate=pl.CostEstimate(
            flops=0,
            transcendentals=0,
            bytes_accessed=2 * rows * l_out * itemsize,
        ),
        compiler_params=pltpu.CompilerParams(
            dimension_semantics=("parallel", "parallel"),
            # 2 * (in + out) double-buffered 4 MiB blocks = 16 MiB; raise the
            # scoped-VMEM limit explicitly (safe on v5e/v6e/v7x physical VMEM).
            vmem_limit_bytes=40 << 20,
        ),
    )(x2)

    return out2.reshape(n, c, l_out)


if __name__ == "__main__":
    k0, k1, k2 = jax.random.split(jax.random.PRNGKey(0), 3)

    # Canonical small shape (batch, channels, length) from the module spec.
    batch, channels, length = 2, 4, 16
    chomp_size = 3
    x = jax.random.normal(k0, (batch, channels, length), dtype=jnp.float32)
    out = jax.block_until_ready(chomp1d(x, chomp_size, force_pallas=True))
    assert out.shape == (batch, channels, length - chomp_size)
    assert out.dtype == x.dtype
    assert jnp.array_equal(out, x[:, :, :-chomp_size])

    # Tiled f32 case: balanced lane tiles + forced 2-step grid (megacore),
    # masked partial last tile (1017 over two 512-wide blocks).
    x2 = jax.random.normal(k1, (2, 16, 1024), dtype=jnp.float32)
    out2 = jax.block_until_ready(chomp1d(x2, 7, force_pallas=True))
    assert out2.shape == (2, 16, 1017)
    assert jnp.array_equal(out2, x2[:, :, :-7])

    # bf16 case: dtype-scaled tiles; last input block overruns L and the
    # chomped tail is masked out on store.
    x3 = jax.random.normal(k2, (4, 8, 640), dtype=jnp.float32).astype(jnp.bfloat16)
    out3 = jax.block_until_ready(chomp1d(x3, 5, force_pallas=True))
    assert out3.shape == (4, 8, 635)
    assert out3.dtype == jnp.bfloat16
    assert jnp.array_equal(out3, x3[:, :, :-5])

    print("KERNEL_OK")
</pallas_src>

<mosaic_0001>
module attributes {stable_mosaic.version = 11 : i64} {
  func.func @_chomp_copy_kernel(%arg0: i32, %arg1: i32, %arg2: memref<8x16xf32, #tpu.memory_space<vmem>>, %arg3: memref<8x13xf32, #tpu.memory_space<vmem>>) attributes {dimension_semantics = [#tpu.dimension_semantics<parallel>, #tpu.dimension_semantics<parallel>], iteration_bounds = array<i64: 1, 1>, scalar_prefetch = 0 : i64, scratch_operands = 0 : i64, tpu.core_type = #tpu.core_type<tc>, window_params = [{transform_indices = @transform_0, window_bounds = array<i64: 8, 16>}, {transform_indices = @transform_1, window_bounds = array<i64: 8, 13>}]} {
    %c0 = arith.constant 0 : index
    %c0_0 = arith.constant 0 : index
    %0 = vector.load %arg2[%c0, %c0_0] : memref<8x16xf32, #tpu.memory_space<vmem>>, vector<8x13xf32>
    %c0_1 = arith.constant 0 : index
    %c0_2 = arith.constant 0 : index
    %1 = vector.load %arg3[%c0_1, %c0_2] : memref<8x13xf32, #tpu.memory_space<vmem>>, vector<8x13xf32>
    tpu.vector_store %arg3[%c0_1, %c0_2], %0 {strides = array<i32>} : memref<8x13xf32, #tpu.memory_space<vmem>>, vector<8x13xf32>,
    return
  }
  func.func @transform_0(%arg0: i32, %arg1: i32) -> (i32, i32) {
    %c0_i32 = arith.constant 0 : i32
    return %arg0, %arg1 : i32, i32
  }
  func.func @transform_1(%arg0: i32, %arg1: i32) -> (i32, i32) {
    %c0_i32 = arith.constant 0 : i32
    return %arg0, %arg1 : i32, i32
  }
}

</mosaic_0001>

<llo_original>
// kernel: tpu_custom_call.1
$region0: #{tpu_custom_call.1}
  #allocation0 [shape = 'u32[]', space=smem, size = 0x4, offset = 0x4, fixed_abs, tag = 'smem constant byte address 0x4 - core index']
  #allocation1 [shape = 'u32[144,128]{1,0:T(1,128)}', space=vmem, size = 0x12000, scoped, tag = 'internal scratch']
  %s0 = inlined_call_operand.hbm [shape: f32[8,16], index: 0, kind: input, shape index: {}]
  %s1 = inlined_call_operand.hbm [shape: f32[8,13], index: 1, kind: output, shape index: {}]
  %s2 = sld [smem:[#allocation0]]
  $region18: #{tpu_custom_call.1} parent=0
    _
  %s4 = ssub.s32 1, %s2
  %s5 = scalar_select 0, %s4, %s2
  $region1: #{tpu_custom_call.1} parent=0
    #allocation2 [shape = 'u8[4096]{0}', space=vmem, size = 0x1000, scoped, tag = 'input window, operand 0, single buffered']
    #allocation3 [shape = 's32[1]{0}', space=sflag, size = 0x4, scoped, tag = 'scoped memory for tpu_custom_call.1']
    #allocation4 [shape = 's32[1]{0}', space=sflag, size = 0x4, scoped, tag = 'scoped memory for tpu_custom_call.1']
    #allocation5 [shape = 'u8[4096]{0}', space=vmem, size = 0x1000, scoped, tag = 'output window, operand 0, single buffered']
    %6 = vsyncpa [#allocation3], 0
    %7 = vsyncpa [#allocation4], 0
    // Predicated region
    $region2: #{tpu_custom_call.1} parent=1 // pred_check
      _
    $region3: #{tpu_custom_call.1} parent=1 // pred_check_branch
      %9 = sbr.rel (0) target = $region5
    $region4: #{tpu_custom_call.1} parent=1 // pred_region
      %s11 = ssub.s32 128, 128
      %12 = vsyncadd [#allocation3], %s11
      %s14 = sshll.u32 [#allocation2], 4
      %s15 = int_to_ptr.vmem [resolvable:$true] %s14
      %17 = dma.hbm_to_vmem [thread:$0]  %s0, 128, %s15, [#allocation3]
    $region5: #{tpu_custom_call.1} parent=1 // pred_fallthru
      _
    // Predicated region
    $region6: #{tpu_custom_call.1} parent=1 // pred_check
      _
    $region7: #{tpu_custom_call.1} parent=1 // pred_check_branch
      %19 = sbr.rel (0) target = $region9
    $region8: #{tpu_custom_call.1} parent=1 // pred_region
      %20 = dma.done [#allocation3], 128
    $region9: #{tpu_custom_call.1} parent=1 // pred_fallthru
      _
    %v21 = vld [vmem:[#allocation2] sm:$0xff]
    %vm22 = vcmask 105472
    %23 = vst.msk [vmem:[#allocation5] sm:$0xff] %vm22, %v21
    // Predicated region
    $region10: #{tpu_custom_call.1} parent=1 // pred_check
      _
    $region11: #{tpu_custom_call.1} parent=1 // pred_check_branch
      %25 = sbr.rel (0) target = $region13
    $region12: #{tpu_custom_call.1} parent=1 // pred_region
      %s27 = ssub.s32 128, 128
      %28 = vsyncadd [#allocation4], %s27
      %s30 = sshll.u32 [#allocation5], 4
      %s31 = int_to_ptr.vmem [resolvable:$true] %s30
      %33 = dma.vmem_to_hbm [thread:$0]  %s31, 128, %s1, [#allocation4]
    $region13: #{tpu_custom_call.1} parent=1 // pred_fallthru
      _
    // Predicated region
    $region14: #{tpu_custom_call.1} parent=1 // pred_check
      _
    $region15: #{tpu_custom_call.1} parent=1 // pred_check_branch
      %35 = sbr.rel (0) target = $region17
    $region16: #{tpu_custom_call.1} parent=1 // pred_region
      %36 = dma.done [#allocation4], 128
    $region17: #{tpu_custom_call.1} parent=1 // pred_fallthru
      _
    %37 = vsyncpa [#allocation3], 1
    %38 = vsyncpa [#allocation4], 1

</llo_original>
